<compile_context>
chip_gen: v7x
topology: tpu7x:2x2x1
jax: 0.10.0
libtpu: 0.0.40
codegen_flags: <defaults>
</compile_context>

<pallas_src>
import jax
import jax.numpy as jnp
from jax.experimental import pallas as pl
from jax.experimental.pallas import tpu as pltpu


def _copy_kernel(x_ref, o_ref):
    # Flatten has no compute: just a (lane-dense) tile copy.
    o_ref[...] = x_ref[...]


def _flatten_dims(shape):
    n = shape[0] if len(shape) > 0 else 1
    d = 1
    for s in shape[1:]:
        d *= s
    return n, d


def _sublane(itemsize):
    # Sublane packing unit: 8 rows for 32-bit, 16 for 16-bit, 32 for 8-bit.
    return 8 * max(1, 4 // itemsize)


def _vmem_capacity_bytes():
    # Chip-aware VMEM budget; conservative fallback = v7x physical (64 MiB).
    try:
        cap = getattr(pltpu.get_tpu_info(), "vmem_capacity_bytes", None)
        if cap:
            return int(cap)
    except Exception:
        pass
    return 64 << 20


def _flatten_alias_minimal(x2, n, d):
    """Aliased output + near-empty grid: copy one tiny in-bounds tile only."""
    itemsize = x2.dtype.itemsize
    sub = _sublane(itemsize)
    bn = sub if n >= sub else n          # multiple of sublane pack, or full extent
    bc = 128 if d >= 128 else d          # one full lane group, or full extent
    spec = pl.BlockSpec((bn, bc), lambda i: (0, 0))
    return pl.pallas_call(
        _copy_kernel,
        out_shape=jax.ShapeDtypeStruct((n, d), x2.dtype),
        grid=(1,),
        in_specs=[spec],
        out_specs=spec,
        input_output_aliases={0: 0},
        cost_estimate=pl.CostEstimate(
            flops=0, transcendentals=0,
            bytes_accessed=2 * bn * bc * itemsize),
        compiler_params=pltpu.CompilerParams(
            dimension_semantics=("arbitrary",)),
    )(x2)


def _flatten_alias_full_copy(x, n, d):
    """Materializing tiled copy (still aliased onto its reshaped input view)."""
    itemsize = x.dtype.itemsize
    sub = _sublane(itemsize)
    total = n * d
    vmem_cap = _vmem_capacity_bytes()
    # ~8 MiB tiles (per-generation sweet spot), bounded so double-buffered
    # in+out (4 x tile) stays well inside VMEM on every generation.
    target_tile_bytes = min(8 << 20, vmem_cap // 8)
    block_budget = vmem_cap // 8

    # Lane (last) dim of the working view: widest power-of-two multiple of 128
    # dividing the element count -> contiguous, full-lane (unmasked) stores.
    cols = 0
    for cand in (2048, 1024, 512, 256, 128):
        if total % cand == 0:
            cols = cand
            break

    if cols == 0:
        # d not 128-aligned: last dim must be full extent (masked edge stores).
        x2 = x.reshape(n, d)
        bn = sub if n >= sub else n
        if bn * d * itemsize > block_budget:
            # Block would not fit comfortably in scoped VMEM; the aliased
            # output already holds the right bytes, so do the minimal copy.
            return _flatten_alias_minimal(x2, n, d)
        spec = pl.BlockSpec((bn, d), lambda i: (i, 0))
        return pl.pallas_call(
            _copy_kernel,
            out_shape=jax.ShapeDtypeStruct((n, d), x.dtype),
            grid=(pl.cdiv(n, bn),),
            in_specs=[spec],
            out_specs=spec,
            input_output_aliases={0: 0},
            cost_estimate=pl.CostEstimate(
                flops=0, transcendentals=0,
                bytes_accessed=2 * total * itemsize),
            compiler_params=pltpu.CompilerParams(
                dimension_semantics=("parallel",),
                vmem_limit_bytes=min(
                    vmem_cap, max(32 << 20, 6 * bn * d * itemsize))),
        )(x2)

    rows = total // cols
    # Rows-axis tile: multiple of `sub` dividing rows, near the target size,
    # split to >=2 grid steps when possible so v7x's two TensorCores share it.
    if rows % sub == 0:
        br = max(sub, (target_tile_bytes // (cols * itemsize)) // sub * sub)
        br = min(br, rows)
        while rows % br != 0:
            br -= sub
        if rows // br < 2 and rows >= 2 * sub:
            br2 = (rows // 2) // sub * sub
            while br2 >= sub and rows % br2 != 0:
                br2 -= sub
            if br2 >= sub:
                br = br2
    else:
        br = rows

    if br * cols * itemsize > block_budget:
        # Rows not sublane-aligned and the single full-extent block is too
        # large: never risk a VMEM OOM — minimal aliased copy is exact anyway.
        return _flatten_alias_minimal(x.reshape(n, d), n, d)

    x2 = x.reshape(rows, cols)
    spec = pl.BlockSpec((br, cols), lambda i: (i, 0))
    out = pl.pallas_call(
        _copy_kernel,
        out_shape=jax.ShapeDtypeStruct((rows, cols), x.dtype),
        grid=(rows // br,),
        in_specs=[spec],
        out_specs=spec,
        input_output_aliases={0: 0},
        cost_estimate=pl.CostEstimate(
            flops=0, transcendentals=0,
            bytes_accessed=2 * total * itemsize),
        compiler_params=pltpu.CompilerParams(
            dimension_semantics=("parallel",),
            vmem_limit_bytes=min(
                vmem_cap, max(32 << 20, 6 * br * cols * itemsize))),
    )(x2)
    return out.reshape(n, d)


def flatten(x: jax.Array, *, full_copy: bool = False) -> jax.Array:
    """Pallas equivalent of torch Flatten.forward: (N, ...) -> (N, prod(...)).

    Default: output aliases the (reshaped) input buffer and only a tiny tile
    is copied (Flatten is byte-identity).  `full_copy=True` materializes the
    result with a tiled, lane-dense, chip-aware copy (still aliased).
    """
    n, d = _flatten_dims(x.shape)
    if n == 0 or d == 0:
        return x.reshape(n, d)
    if not full_copy:
        return _flatten_alias_minimal(x.reshape(n, d), n, d)
    return _flatten_alias_full_copy(x, n, d)


if __name__ == "__main__":
    # Primary case: small NCHW feature map, default (aliased, minimal-copy) path.
    x = jax.random.normal(jax.random.PRNGKey(0), (2, 4, 16, 16), dtype=jnp.float32)
    ref = x.reshape(x.shape[0], -1)
    out = jax.block_until_ready(flatten(x))
    assert out.shape == ref.shape, (out.shape, ref.shape)
    assert out.dtype == ref.dtype, (out.dtype, ref.dtype)
    assert jnp.array_equal(out, ref), "Flatten kernel mismatch (minimal alias path)"

    # Tiled full-copy path (exercises chip-aware tiling and the >=2-step grid).
    x2 = jax.random.normal(jax.random.PRNGKey(1), (8, 32, 16, 16), dtype=jnp.float32)
    ref2 = x2.reshape(x2.shape[0], -1)
    out2 = jax.block_until_ready(flatten(x2, full_copy=True))
    assert jnp.array_equal(out2, ref2), "Flatten kernel mismatch (full-copy path)"

    # Non-128-aligned feature size (fallback path, full-extent tiny block).
    x3 = jax.random.normal(jax.random.PRNGKey(2), (2, 3, 5, 7), dtype=jnp.float32)
    ref3 = x3.reshape(x3.shape[0], -1)
    out3 = jax.block_until_ready(flatten(x3))
    assert jnp.array_equal(out3, ref3), "Flatten kernel mismatch (non-aligned path)"

    print("KERNEL_OK")
</pallas_src>

<mosaic_0001>
module attributes {stable_mosaic.version = 11 : i64} {
  func.func @_copy_kernel(%arg0: i32, %arg1: memref<2x128xf32, #tpu.memory_space<vmem>>, %arg2: memref<2x128xf32, #tpu.memory_space<vmem>>) attributes {dimension_semantics = [#tpu.dimension_semantics<arbitrary>], iteration_bounds = array<i64: 1>, scalar_prefetch = 0 : i64, scratch_operands = 0 : i64, tpu.core_type = #tpu.core_type<tc>, window_params = [{transform_indices = @transform_0, window_bounds = array<i64: 2, 128>}, {transform_indices = @transform_1, window_bounds = array<i64: 2, 128>}]} {
    %c0 = arith.constant 0 : index
    %c0_0 = arith.constant 0 : index
    %0 = vector.load %arg1[%c0, %c0_0] : memref<2x128xf32, #tpu.memory_space<vmem>>, vector<2x128xf32>
    %c0_1 = arith.constant 0 : index
    %c0_2 = arith.constant 0 : index
    %1 = vector.load %arg2[%c0_1, %c0_2] : memref<2x128xf32, #tpu.memory_space<vmem>>, vector<2x128xf32>
    tpu.vector_store %arg2[%c0_1, %c0_2], %0 {strides = array<i32>} : memref<2x128xf32, #tpu.memory_space<vmem>>, vector<2x128xf32>,
    return
  }
  func.func @transform_0(%arg0: i32) -> (i32, i32) {
    %c0_i32 = arith.constant 0 : i32
    %c0_i32_0 = arith.constant 0 : i32
    %c0_i32_1 = arith.constant 0 : i32
    return %c0_i32, %c0_i32_0 : i32, i32
  }
  func.func @transform_1(%arg0: i32) -> (i32, i32) {
    %c0_i32 = arith.constant 0 : i32
    %c0_i32_0 = arith.constant 0 : i32
    %c0_i32_1 = arith.constant 0 : i32
    return %c0_i32, %c0_i32_0 : i32, i32
  }
}

</mosaic_0001>

<llo_original>
// kernel: tpu_custom_call.1
$region0: #{tpu_custom_call.1}
  #allocation0 [shape = 'u32[]', space=smem, size = 0x4, offset = 0x4, fixed_abs, tag = 'smem constant byte address 0x4 - core index']
  #allocation1 [shape = 'u32[144,128]{1,0:T(1,128)}', space=vmem, size = 0x12000, scoped, tag = 'internal scratch']
  %s0 = inlined_call_operand.hbm [shape: f32[2,1024], index: 0, kind: input, shape index: {}, may-alias: {0,1}]
  %s1 = inlined_call_operand.hbm [shape: f32[2,1024], index: 1, kind: output, shape index: {}, may-alias: {0,1}]
  %s2 = sld [smem:[#allocation0]]
  $region18: #{tpu_custom_call.1} parent=0
    _
  %s4 = ssub.s32 1, %s2
  %s5 = scalar_select 0, %s4, %s2
  $region1: #{tpu_custom_call.1} parent=0
    #allocation2 [shape = 'u8[1024]{0}', space=vmem, size = 0x400, scoped, tag = 'input window, operand 0, single buffered']
    #allocation3 [shape = 's32[1]{0}', space=sflag, size = 0x4, scoped, tag = 'scoped memory for tpu_custom_call.1']
    #allocation4 [shape = 's32[1]{0}', space=sflag, size = 0x4, scoped, tag = 'scoped memory for tpu_custom_call.1']
    #allocation5 [shape = 'u8[1024]{0}', space=vmem, size = 0x400, scoped, tag = 'output window, operand 0, single buffered']
    %6 = vsyncpa [#allocation3], 0
    %7 = vsyncpa [#allocation4], 0
    // Predicated region
    $region2: #{tpu_custom_call.1} parent=1 // pred_check
      _
    $region3: #{tpu_custom_call.1} parent=1 // pred_check_branch
      %9 = sbr.rel (0) target = $region5
    $region4: #{tpu_custom_call.1} parent=1 // pred_region
      %s11 = ssub.s32 32, 32
      %12 = vsyncadd [#allocation3], %s11
      %s14 = sshll.u32 [#allocation2], 4
      %s15 = int_to_ptr.vmem [resolvable:$true] %s14
      %17 = dma.hbm_to_vmem [thread:$0]  %s0, 32, %s15, [#allocation3]
    $region5: #{tpu_custom_call.1} parent=1 // pred_fallthru
      _
    // Predicated region
    $region6: #{tpu_custom_call.1} parent=1 // pred_check
      _
    $region7: #{tpu_custom_call.1} parent=1 // pred_check_branch
      %19 = sbr.rel (0) target = $region9
    $region8: #{tpu_custom_call.1} parent=1 // pred_region
      %20 = dma.done [#allocation3], 32
    $region9: #{tpu_custom_call.1} parent=1 // pred_fallthru
      _
    %v21 = vld [vmem:[#allocation2] sm:$0x3]
    %22 = vst [vmem:[#allocation5] sm:$0x3] %v21
    // Predicated region
    $region10: #{tpu_custom_call.1} parent=1 // pred_check
      _
    $region11: #{tpu_custom_call.1} parent=1 // pred_check_branch
      %24 = sbr.rel (0) target = $region13
    $region12: #{tpu_custom_call.1} parent=1 // pred_region
      %s26 = ssub.s32 32, 32
      %27 = vsyncadd [#allocation4], %s26
      %s29 = sshll.u32 [#allocation5], 4
      %s30 = int_to_ptr.vmem [resolvable:$true] %s29
      %32 = dma.vmem_to_hbm [thread:$0]  %s30, 32, %s1, [#allocation4]
    $region13: #{tpu_custom_call.1} parent=1 // pred_fallthru
      _
    // Predicated region
    $region14: #{tpu_custom_call.1} parent=1 // pred_check
      _
    $region15: #{tpu_custom_call.1} parent=1 // pred_check_branch
      %34 = sbr.rel (0) target = $region17
    $region16: #{tpu_custom_call.1} parent=1 // pred_region
      %35 = dma.done [#allocation4], 32
    $region17: #{tpu_custom_call.1} parent=1 // pred_fallthru
      _
    %36 = vsyncpa [#allocation3], 1
    %37 = vsyncpa [#allocation4], 1

</llo_original>
